<compile_context>
chip_gen: v7x
topology: tpu7x:2x2x1
jax: 0.10.0
libtpu: 0.0.40
codegen_flags: <defaults>
</compile_context>

<pallas_src>
import functools

import jax
import jax.numpy as jnp
import numpy as np
from jax import lax
from jax.experimental import pallas as pl
from jax.experimental.pallas import tpu as pltpu


# Tap order matches conv weight [ky, kx] row-major: dy = ky - 1, dx = kx - 1.
_TAPS = tuple((dy, dx) for dy in (-1, 0, 1) for dx in (-1, 0, 1))


def _fuzzy_kernel(mu_ref, inv_sig2_ref, w_ref, misc_ref, masks_ref, x_ref, o_ref,
                  *, n, C, W, HWp, c_chunk, residual, exp_in_bf16):
    """One grid step: Bt images in lane-dense (Bt, C, HWp) layout."""
    Bt = x_ref.shape[0]
    num_chunks = C // c_chunk
    inv_C = jnp.float32(1.0 / C)

    def partial_mean(xc, mu, inv_s2):
        # xc: (Bt, c_chunk, HWp) in the input dtype; math in f32 (or bf16 exp).
        z = xc.astype(jnp.float32) - mu
        q = -(z * z) * inv_s2
        if exp_in_bf16:
            e = jnp.exp(q.astype(jnp.bfloat16)).astype(jnp.float32)
        else:
            e = jnp.exp(q)
        return jnp.sum(e, axis=1)                          # (Bt, HWp) f32

    # --- fuzzy membership -> channel mean -> per-tap weighted accumulation ---
    tap_acc = [jnp.zeros((Bt, HWp), jnp.float32) for _ in range(9)]
    for k in range(n):
        mu = mu_ref[k]
        inv_s2 = inv_sig2_ref[k]
        if num_chunks == 1:
            tmp_k = partial_mean(x_ref[...], mu, inv_s2)
        else:
            def body(i, tmp, mu=mu, inv_s2=inv_s2):
                c0 = pl.multiple_of(i * c_chunk, c_chunk)
                xc = x_ref[:, pl.ds(c0, c_chunk), :]
                return tmp + partial_mean(xc, mu, inv_s2)
            tmp_k = lax.fori_loop(0, num_chunks, body,
                                  jnp.zeros((Bt, HWp), jnp.float32))
        tmp_k = tmp_k * inv_C                              # channel mean
        for t in range(9):
            tap_acc[t] = tap_acc[t] + tmp_k * w_ref[k * 9 + t]

    # --- 3x3 SAME conv: 9 lane rotations + border masks, done once ----------
    acc = jnp.zeros((Bt, HWp), jnp.float32)
    for t, (dy, dx) in enumerate(_TAPS):
        # rolled[i] = tap_acc[t][(i + dy*W + dx) mod HWp]   (jnp.roll semantics)
        shift = (HWp - (dy * W + dx)) % HWp
        a = tap_acc[t]
        rolled = a if shift == 0 else pltpu.roll(a, shift=shift, axis=1)
        acc = acc + rolled * masks_ref[t:t + 1, :]

    bias = misc_ref[0]
    bn_scale = misc_ref[1]
    bn_shift = misc_ref[2]
    f = jax.nn.sigmoid((acc + bias) * bn_scale + bn_shift)  # (Bt, HWp)
    if residual:
        f = f + 1.0                                         # x*f + x == x*(f+1)
    f = f[:, None, :]

    # --- apply attention, ref-sliced per channel chunk -----------------------
    if num_chunks == 1:
        o_ref[...] = (x_ref[...].astype(jnp.float32) * f).astype(o_ref.dtype)
    else:
        def out_body(i, carry):
            c0 = pl.multiple_of(i * c_chunk, c_chunk)
            xc = x_ref[:, pl.ds(c0, c_chunk), :].astype(jnp.float32)
            o_ref[:, pl.ds(c0, c_chunk), :] = (xc * f).astype(o_ref.dtype)
            return carry
        lax.fori_loop(0, num_chunks, out_body, 0)


def _round_up(v, m):
    return (v + m - 1) // m * m


def _choose_tiling(B, C, HWp, itemsize):
    """Batch-tile size and VMEM limit, per TPU generation."""
    try:
        kind = jax.devices()[0].device_kind.lower()
    except Exception:
        kind = ""
    if "v7" in kind:                      # 2 TCs / chip, 64 MiB VMEM per TC
        two_cores, budget, vmem_limit = True, 20 << 20, 48 << 20
    elif "v6" in kind:                    # 1 TC, 128 MiB VMEM
        two_cores, budget, vmem_limit = False, 48 << 20, 100 << 20
    elif "v5p" in kind or "v4" in kind:   # megacore: 2 TCs
        two_cores, budget, vmem_limit = True, 24 << 20, 64 << 20
    elif "v5" in kind:                    # v5e: 1 TC, small scoped default
        two_cores, budget, vmem_limit = False, 24 << 20, 64 << 20
    else:                                 # unknown / interpret: conservative
        two_cores, budget, vmem_limit = False, 16 << 20, None

    sub = 8 if itemsize >= 4 else 16                     # sublane packing
    per_image = _round_up(C, sub) * HWp * itemsize       # padded (C, HWp) slab
    bt = max(1, budget // (4 * per_image))               # in+out, double-buffered
    bt = min(bt, B)
    if two_cores and B >= 2:
        bt = min(bt, max(1, B // 2))                     # keep >=2 grid steps
    if bt >= 8:
        bt = (bt // 8) * 8                               # fill sublanes for (Bt,HW) stage
    while B % bt:
        bt -= 1
    return int(bt), vmem_limit


def fuzzy_spatial_att(x, mu, sigma, conv_w, conv_b,
                      bn_gamma, bn_beta, bn_mean, bn_var,
                      *, eps=1e-5, residual=True, exp_in_bf16=False):
    """x: (B, C, H, W).  mu/sigma: (n,) or (n,1,1,1).  conv_w: (1, n, 3, 3)."""
    B, C, H, W = x.shape
    n = int(np.prod(mu.shape))
    HW = H * W
    HWp = _round_up(HW, 128)

    # Fold BatchNorm (eval mode) into a scalar scale/shift; precompute 1/sigma^2.
    bn_scale = bn_gamma.reshape(-1)[0] / jnp.sqrt(bn_var.reshape(-1)[0] + eps)
    bn_shift = bn_beta.reshape(-1)[0] - bn_mean.reshape(-1)[0] * bn_scale
    misc = jnp.stack([conv_b.reshape(-1)[0], bn_scale, bn_shift]).astype(jnp.float32)

    mu32 = mu.reshape(n).astype(jnp.float32)
    inv_sig2 = 1.0 / (sigma.reshape(n).astype(jnp.float32) ** 2)
    w_flat = conv_w.reshape(n * 9).astype(jnp.float32)   # [k, ky, kx] row-major

    # Host-side border masks for the 9 conv taps, zero in the lane-pad region.
    masks_np = np.zeros((9, HWp), np.float32)
    idx = np.arange(HW)
    row, col = idx // W, idx % W
    for t, (dy, dx) in enumerate(_TAPS):
        ok = (row + dy >= 0) & (row + dy < H) & (col + dx >= 0) & (col + dx < W)
        masks_np[t, :HW] = ok.astype(np.float32)
    masks = jnp.asarray(masks_np)

    # Keep x in its input dtype; lane-dense padded HW.
    x_flat = x.reshape(B, C, HW)
    if HWp != HW:
        x_flat = jnp.pad(x_flat, ((0, 0), (0, 0), (0, HWp - HW)))

    itemsize = jnp.dtype(x.dtype).itemsize
    bt, vmem_limit = _choose_tiling(B, C, HWp, itemsize)
    c_chunk = next(d for d in range(min(C, 32), 0, -1) if C % d == 0)

    kernel = functools.partial(_fuzzy_kernel, n=n, C=C, W=W, HWp=HWp,
                               c_chunk=c_chunk, residual=residual,
                               exp_in_bf16=exp_in_bf16)
    smem_spec = pl.BlockSpec(memory_space=pltpu.MemorySpace.SMEM)

    out = pl.pallas_call(
        kernel,
        out_shape=jax.ShapeDtypeStruct((B, C, HWp), x.dtype),
        grid=(B // bt,),
        in_specs=[
            smem_spec,                                        # mu       (n,)
            smem_spec,                                        # 1/sig^2  (n,)
            smem_spec,                                        # conv w   (n*9,)
            smem_spec,                                        # bias/bn  (3,)
            pl.BlockSpec((9, HWp), lambda b: (0, 0)),         # tap masks
            pl.BlockSpec((bt, C, HWp), lambda b: (b, 0, 0)),  # x
        ],
        out_specs=pl.BlockSpec((bt, C, HWp), lambda b: (b, 0, 0)),
        compiler_params=pltpu.CompilerParams(
            dimension_semantics=("parallel",),
            vmem_limit_bytes=vmem_limit),
    )(mu32, inv_sig2, w_flat, misc, masks, x_flat)

    return out[:, :, :HW].reshape(B, C, H, W)


def reference(x, mu, sigma, conv_w, conv_b, bn_gamma, bn_beta, bn_mean, bn_var,
              *, eps=1e-5, residual=True):
    """Pure-JAX reference mirroring the PyTorch forward (eval-mode BN)."""
    xe = x[:, None]                                          # (B,1,C,H,W)
    mu_b = mu.reshape(-1)[None, :, None, None, None]
    sg_b = sigma.reshape(-1)[None, :, None, None, None]
    tmp = -(((xe - mu_b) / sg_b) ** 2)
    tmp = jnp.mean(jnp.exp(tmp), axis=2)                     # (B,n,H,W)
    conv = jax.lax.conv_general_dilated(
        tmp, conv_w, window_strides=(1, 1), padding="SAME",
        dimension_numbers=("NCHW", "OIHW", "NCHW")) + conv_b[None, :, None, None]
    bn_scale = bn_gamma / jnp.sqrt(bn_var + eps)
    bn_shift = bn_beta - bn_mean * bn_scale
    f = jax.nn.sigmoid(conv * bn_scale[None, :, None, None]
                       + bn_shift[None, :, None, None])      # (B,1,H,W)
    return f * x + x if residual else f * x


if __name__ == "__main__":
    B, C, H, W = 2, 4, 16, 16
    n = 4  # number of fuzzy membership functions

    key = jax.random.PRNGKey(0)
    k_x, k_mu, k_sig, k_w, k_b = jax.random.split(key, 5)

    x = jax.random.normal(k_x, (B, C, H, W), dtype=jnp.float32)

    # Module parameters (deterministic synthetic init).
    mu = jax.random.normal(k_mu, (n,), dtype=jnp.float32)        # (n,1,1,1) squeezed
    sigma = jax.random.normal(k_sig, (n,), dtype=jnp.float32)
    conv_w = 0.1 * jax.random.normal(k_w, (1, n, 3, 3), dtype=jnp.float32)
    conv_b = 0.1 * jax.random.normal(k_b, (1,), dtype=jnp.float32)
    bn_gamma = jnp.ones((1,), jnp.float32)
    bn_beta = jnp.zeros((1,), jnp.float32)
    bn_mean = jnp.zeros((1,), jnp.float32)
    bn_var = jnp.ones((1,), jnp.float32)

    out = fuzzy_spatial_att(x, mu, sigma, conv_w, conv_b,
                            bn_gamma, bn_beta, bn_mean, bn_var,
                            residual=True)
    out = jax.block_until_ready(out)

    ref = reference(x, mu, sigma, conv_w, conv_b,
                    bn_gamma, bn_beta, bn_mean, bn_var, residual=True)
    np.testing.assert_allclose(np.asarray(out), np.asarray(ref),
                               rtol=1e-4, atol=1e-5)
    print("KERNEL_OK")
</pallas_src>

<mosaic_0001>
module attributes {stable_mosaic.version = 11 : i64} {
  func.func @_fuzzy_kernel(%arg0: i32, %arg1: memref<4xf32, #tpu.memory_space<smem>>, %arg2: memref<4xf32, #tpu.memory_space<smem>>, %arg3: memref<36xf32, #tpu.memory_space<smem>>, %arg4: memref<3xf32, #tpu.memory_space<smem>>, %arg5: memref<9x256xf32, #tpu.memory_space<vmem>>, %arg6: memref<2x4x256xf32, #tpu.memory_space<vmem>>, %arg7: memref<2x4x256xf32, #tpu.memory_space<vmem>>) attributes {dimension_semantics = [#tpu.dimension_semantics<parallel>], iteration_bounds = array<i64: 1>, scalar_prefetch = 0 : i64, scratch_operands = 0 : i64, tpu.core_type = #tpu.core_type<tc>, window_params = [{transform_indices = @transform_0, window_bounds = array<i64: 4>}, {transform_indices = @transform_1, window_bounds = array<i64: 4>}, {transform_indices = @transform_2, window_bounds = array<i64: 36>}, {transform_indices = @transform_3, window_bounds = array<i64: 3>}, {pipeline_mode = #tpu.pipeline_mode<synchronous>, transform_indices = @transform_4, window_bounds = array<i64: 9, 256>}, {transform_indices = @transform_5, window_bounds = array<i64: 2, 4, 256>}, {transform_indices = @transform_6, window_bounds = array<i64: 2, 4, 256>}]} {
    %cst = arith.constant 0.000000e+00 : f32
    %0 = vector.broadcast %cst : f32 to vector<2x256xf32>
    %cst_0 = arith.constant 0.000000e+00 : f32
    %1 = vector.broadcast %cst_0 : f32 to vector<2x256xf32>
    %cst_1 = arith.constant 0.000000e+00 : f32
    %2 = vector.broadcast %cst_1 : f32 to vector<2x256xf32>
    %cst_2 = arith.constant 0.000000e+00 : f32
    %3 = vector.broadcast %cst_2 : f32 to vector<2x256xf32>
    %cst_3 = arith.constant 0.000000e+00 : f32
    %4 = vector.broadcast %cst_3 : f32 to vector<2x256xf32>
    %cst_4 = arith.constant 0.000000e+00 : f32
    %5 = vector.broadcast %cst_4 : f32 to vector<2x256xf32>
    %cst_5 = arith.constant 0.000000e+00 : f32
    %6 = vector.broadcast %cst_5 : f32 to vector<2x256xf32>
    %cst_6 = arith.constant 0.000000e+00 : f32
    %7 = vector.broadcast %cst_6 : f32 to vector<2x256xf32>
    %cst_7 = arith.constant 0.000000e+00 : f32
    %8 = vector.broadcast %cst_7 : f32 to vector<2x256xf32>
    %c0 = arith.constant 0 : index
    %9 = memref.load %arg1[%c0] : memref<4xf32, #tpu.memory_space<smem>>
    %c0_8 = arith.constant 0 : index
    %10 = memref.load %arg2[%c0_8] : memref<4xf32, #tpu.memory_space<smem>>
    %c0_9 = arith.constant 0 : index
    %c0_10 = arith.constant 0 : index
    %c0_11 = arith.constant 0 : index
    %11 = vector.load %arg6[%c0_9, %c0_10, %c0_11] : memref<2x4x256xf32, #tpu.memory_space<vmem>>, vector<2x4x256xf32>
    %12 = vector.broadcast %9 : f32 to vector<2x4x256xf32>
    %13 = arith.subf %11, %12 : vector<2x4x256xf32>
    %14 = arith.mulf %13, %13 : vector<2x4x256xf32>
    %cst_12 = arith.constant 0.000000e+00 : f32
    %15 = vector.broadcast %cst_12 : f32 to vector<2x4x256xf32>
    %16 = arith.subf %15, %14 : vector<2x4x256xf32>
    %17 = vector.broadcast %10 : f32 to vector<2x4x256xf32>
    %18 = arith.mulf %16, %17 : vector<2x4x256xf32>
    %19 = math.exp %18 : vector<2x4x256xf32>
    %cst_13 = arith.constant dense<0.000000e+00> : vector<2x256xf32>
    %20 = vector.multi_reduction <add>, %19, %cst_13 [1] : vector<2x4x256xf32> to vector<2x256xf32>
    %cst_14 = arith.constant 2.500000e-01 : f32
    %21 = vector.broadcast %cst_14 : f32 to vector<2x256xf32>
    %22 = arith.mulf %20, %21 : vector<2x256xf32>
    %c0_15 = arith.constant 0 : index
    %23 = memref.load %arg3[%c0_15] : memref<36xf32, #tpu.memory_space<smem>>
    %24 = vector.broadcast %23 : f32 to vector<2x256xf32>
    %25 = arith.mulf %22, %24 : vector<2x256xf32>
    %26 = arith.addf %0, %25 : vector<2x256xf32>
    %c1 = arith.constant 1 : index
    %27 = memref.load %arg3[%c1] : memref<36xf32, #tpu.memory_space<smem>>
    %28 = vector.broadcast %27 : f32 to vector<2x256xf32>
    %29 = arith.mulf %22, %28 : vector<2x256xf32>
    %30 = arith.addf %1, %29 : vector<2x256xf32>
    %c2 = arith.constant 2 : index
    %31 = memref.load %arg3[%c2] : memref<36xf32, #tpu.memory_space<smem>>
    %32 = vector.broadcast %31 : f32 to vector<2x256xf32>
    %33 = arith.mulf %22, %32 : vector<2x256xf32>
    %34 = arith.addf %2, %33 : vector<2x256xf32>
    %c3 = arith.constant 3 : index
    %35 = memref.load %arg3[%c3] : memref<36xf32, #tpu.memory_space<smem>>
    %36 = vector.broadcast %35 : f32 to vector<2x256xf32>
    %37 = arith.mulf %22, %36 : vector<2x256xf32>
    %38 = arith.addf %3, %37 : vector<2x256xf32>
    %c4 = arith.constant 4 : index
    %39 = memref.load %arg3[%c4] : memref<36xf32, #tpu.memory_space<smem>>
    %40 = vector.broadcast %39 : f32 to vector<2x256xf32>
    %41 = arith.mulf %22, %40 : vector<2x256xf32>
    %42 = arith.addf %4, %41 : vector<2x256xf32>
    %c5 = arith.constant 5 : index
    %43 = memref.load %arg3[%c5] : memref<36xf32, #tpu.memory_space<smem>>
    %44 = vector.broadcast %43 : f32 to vector<2x256xf32>
    %45 = arith.mulf %22, %44 : vector<2x256xf32>
    %46 = arith.addf %5, %45 : vector<2x256xf32>
    %c6 = arith.constant 6 : index
    %47 = memref.load %arg3[%c6] : memref<36xf32, #tpu.memory_space<smem>>
    %48 = vector.broadcast %47 : f32 to vector<2x256xf32>
    %49 = arith.mulf %22, %48 : vector<2x256xf32>
    %50 = arith.addf %6, %49 : vector<2x256xf32>
    %c7 = arith.constant 7 : index
    %51 = memref.load %arg3[%c7] : memref<36xf32, #tpu.memory_space<smem>>
    %52 = vector.broadcast %51 : f32 to vector<2x256xf32>
    %53 = arith.mulf %22, %52 : vector<2x256xf32>
    %54 = arith.addf %7, %53 : vector<2x256xf32>
    %c8 = arith.constant 8 : index
    %55 = memref.load %arg3[%c8] : memref<36xf32, #tpu.memory_space<smem>>
    %56 = vector.broadcast %55 : f32 to vector<2x256xf32>
    %57 = arith.mulf %22, %56 : vector<2x256xf32>
    %58 = arith.addf %8, %57 : vector<2x256xf32>
    %c1_16 = arith.constant 1 : index
    %59 = memref.load %arg1[%c1_16] : memref<4xf32, #tpu.memory_space<smem>>
    %c1_17 = arith.constant 1 : index
    %60 = memref.load %arg2[%c1_17] : memref<4xf32, #tpu.memory_space<smem>>
    %c0_18 = arith.constant 0 : index
    %c0_19 = arith.constant 0 : index
    %c0_20 = arith.constant 0 : index
    %61 = vector.load %arg6[%c0_18, %c0_19, %c0_20] : memref<2x4x256xf32, #tpu.memory_space<vmem>>, vector<2x4x256xf32>
    %62 = vector.broadcast %59 : f32 to vector<2x4x256xf32>
    %63 = arith.subf %61, %62 : vector<2x4x256xf32>
    %64 = arith.mulf %63, %63 : vector<2x4x256xf32>
    %cst_21 = arith.constant 0.000000e+00 : f32
    %65 = vector.broadcast %cst_21 : f32 to vector<2x4x256xf32>
    %66 = arith.subf %65, %64 : vector<2x4x256xf32>
    %67 = vector.broadcast %60 : f32 to vector<2x4x256xf32>
    %68 = arith.mulf %66, %67 : vector<2x4x256xf32>
    %69 = math.exp %68 : vector<2x4x256xf32>
    %cst_22 = arith.constant dense<0.000000e+00> : vector<2x256xf32>
    %70 = vector.multi_reduction <add>, %69, %cst_22 [1] : vector<2x4x256xf32> to vector<2x256xf32>
    %cst_23 = arith.constant 2.500000e-01 : f32
    %71 = vector.broadcast %cst_23 : f32 to vector<2x256xf32>
    %72 = arith.mulf %70, %71 : vector<2x256xf32>
    %c9 = arith.constant 9 : index
    %73 = memref.load %arg3[%c9] : memref<36xf32, #tpu.memory_space<smem>>
    %74 = vector.broadcast %73 : f32 to vector<2x256xf32>
    %75 = arith.mulf %72, %74 : vector<2x256xf32>
    %76 = arith.addf %26, %75 : vector<2x256xf32>
    %c10 = arith.constant 10 : index
    %77 = memref.load %arg3[%c10] : memref<36xf32, #tpu.memory_space<smem>>
    %78 = vector.broadcast %77 : f32 to vector<2x256xf32>
    %79 = arith.mulf %72, %78 : vector<2x256xf32>
    %80 = arith.addf %30, %79 : vector<2x256xf32>
    %c11 = arith.constant 11 : index
    %81 = memref.load %arg3[%c11] : memref<36xf32, #tpu.memory_space<smem>>
    %82 = vector.broadcast %81 : f32 to vector<2x256xf32>
    %83 = arith.mulf %72, %82 : vector<2x256xf32>
    %84 = arith.addf %34, %83 : vector<2x256xf32>
    %c12 = arith.constant 12 : index
    %85 = memref.load %arg3[%c12] : memref<36xf32, #tpu.memory_space<smem>>
    %86 = vector.broadcast %85 : f32 to vector<2x256xf32>
    %87 = arith.mulf %72, %86 : vector<2x256xf32>
    %88 = arith.addf %38, %87 : vector<2x256xf32>
    %c13 = arith.constant 13 : index
    %89 = memref.load %arg3[%c13] : memref<36xf32, #tpu.memory_space<smem>>
    %90 = vector.broadcast %89 : f32 to vector<2x256xf32>
    %91 = arith.mulf %72, %90 : vector<2x256xf32>
    %92 = arith.addf %42, %91 : vector<2x256xf32>
    %c14 = arith.constant 14 : index
    %93 = memref.load %arg3[%c14] : memref<36xf32, #tpu.memory_space<smem>>
    %94 = vector.broadcast %93 : f32 to vector<2x256xf32>
    %95 = arith.mulf %72, %94 : vector<2x256xf32>
    %96 = arith.addf %46, %95 : vector<2x256xf32>
    %c15 = arith.constant 15 : index
    %97 = memref.load %arg3[%c15] : memref<36xf32, #tpu.memory_space<smem>>
    %98 = vector.broadcast %97 : f32 to vector<2x256xf32>
    %99 = arith.mulf %72, %98 : vector<2x256xf32>
    %100 = arith.addf %50, %99 : vector<2x256xf32>
    %c16 = arith.constant 16 : index
    %101 = memref.load %arg3[%c16] : memref<36xf32, #tpu.memory_space<smem>>
    %102 = vector.broadcast %101 : f32 to vector<2x256xf32>
    %103 = arith.mulf %72, %102 : vector<2x256xf32>
    %104 = arith.addf %54, %103 : vector<2x256xf32>
    %c17 = arith.constant 17 : index
    %105 = memref.load %arg3[%c17] : memref<36xf32, #tpu.memory_space<smem>>
    %106 = vector.broadcast %105 : f32 to vector<2x256xf32>
    %107 = arith.mulf %72, %106 : vector<2x256xf32>
    %108 = arith.addf %58, %107 : vector<2x256xf32>
    %c2_24 = arith.constant 2 : index
    %109 = memref.load %arg1[%c2_24] : memref<4xf32, #tpu.memory_space<smem>>
    %c2_25 = arith.constant 2 : index
    %110 = memref.load %arg2[%c2_25] : memref<4xf32, #tpu.memory_space<smem>>
    %c0_26 = arith.constant 0 : index
    %c0_27 = arith.constant 0 : index
    %c0_28 = arith.constant 0 : index
    %111 = vector.load %arg6[%c0_26, %c0_27, %c0_28] : memref<2x4x256xf32, #tpu.memory_space<vmem>>, vector<2x4x256xf32>
    %112 = vector.broadcast %109 : f32 to vector<2x4x256xf32>
    %113 = arith.subf %111, %112 : vector<2x4x256xf32>
    %114 = arith.mulf %113, %113 : vector<2x4x256xf32>
    %cst_29 = arith.constant 0.000000e+00 : f32
    %115 = vector.broadcast %cst_29 : f32 to vector<2x4x256xf32>
    %116 = arith.subf %115, %114 : vector<2x4x256xf32>
    %117 = vector.broadcast %110 : f32 to vector<2x4x256xf32>
    %118 = arith.mulf %116, %117 : vector<2x4x256xf32>
    %119 = math.exp %118 : vector<2x4x256xf32>
    %cst_30 = arith.constant dense<0.000000e+00> : vector<2x256xf32>
    %120 = vector.multi_reduction <add>, %119, %cst_30 [1] : vector<2x4x256xf32> to vector<2x256xf32>
    %cst_31 = arith.constant 2.500000e-01 : f32
    %121 = vector.broadcast %cst_31 : f32 to vector<2x256xf32>
    %122 = arith.mulf %120, %121 : vector<2x256xf32>
    %c18 = arith.constant 18 : index
    %123 = memref.load %arg3[%c18] : memref<36xf32, #tpu.memory_space<smem>>
    %124 = vector.broadcast %123 : f32 to vector<2x256xf32>
    %125 = arith.mulf %122, %124 : vector<2x256xf32>
    %126 = arith.addf %76, %125 : vector<2x256xf32>
    %c19 = arith.constant 19 : index
    %127 = memref.load %arg3[%c19] : memref<36xf32, #tpu.memory_space<smem>>
    %128 = vector.broadcast %127 : f32 to vector<2x256xf32>
    %129 = arith.mulf %122, %128 : vector<2x256xf32>
    %130 = arith.addf %80, %129 : vector<2x256xf32>
    %c20 = arith.constant 20 : index
    %131 = memref.load %arg3[%c20] : memref<36xf32, #tpu.memory_space<smem>>
    %132 = vector.broadcast %131 : f32 to vector<2x256xf32>
    %133 = arith.mulf %122, %132 : vector<2x256xf32>
    %134 = arith.addf %84, %133 : vector<2x256xf32>
    %c21 = arith.constant 21 : index
    %135 = memref.load %arg3[%c21] : memref<36xf32, #tpu.memory_space<smem>>
    %136 = vector.broadcast %135 : f32 to vector<2x256xf32>
    %137 = arith.mulf %122, %136 : vector<2x256xf32>
    %138 = arith.addf %88, %137 : vector<2x256xf32>
    %c22 = arith.constant 22 : index
    %139 = memref.load %arg3[%c22] : memref<36xf32, #tpu.memory_space<smem>>
    %140 = vector.broadcast %139 : f32 to vector<2x256xf32>
    %141 = arith.mulf %122, %140 : vector<2x256xf32>
    %142 = arith.addf %92, %141 : vector<2x256xf32>
    %c23 = arith.constant 23 : index
    %143 = memref.load %arg3[%c23] : memref<36xf32, #tpu.memory_space<smem>>
    %144 = vector.broadcast %143 : f32 to vector<2x256xf32>
    %145 = arith.mulf %122, %144 : vector<2x256xf32>
    %146 = arith.addf %96, %145 : vector<2x256xf32>
    %c24 = arith.constant 24 : index
    %147 = memref.load %arg3[%c24] : memref<36xf32, #tpu.memory_space<smem>>
    %148 = vector.broadcast %147 : f32 to vector<2x256xf32>
    %149 = arith.mulf %122, %148 : vector<2x256xf32>
    %150 = arith.addf %100, %149 : vector<2x256xf32>
    %c25 = arith.constant 25 : index
    %151 = memref.load %arg3[%c25] : memref<36xf32, #tpu.memory_space<smem>>
    %152 = vector.broadcast %151 : f32 to vector<2x256xf32>
    %153 = arith.mulf %122, %152 : vector<2x256xf32>
    %154 = arith.addf %104, %153 : vector<2x256xf32>
    %c26 = arith.constant 26 : index
    %155 = memref.load %arg3[%c26] : memref<36xf32, #tpu.memory_space<smem>>
    %156 = vector.broadcast %155 : f32 to vector<2x256xf32>
    %157 = arith.mulf %122, %156 : vector<2x256xf32>
    %158 = arith.addf %108, %157 : vector<2x256xf32>
    %c3_32 = arith.constant 3 : index
    %159 = memref.load %arg1[%c3_32] : memref<4xf32, #tpu.memory_space<smem>>
    %c3_33 = arith.constant 3 : index
    %160 = memref.load %arg2[%c3_33] : memref<4xf32, #tpu.memory_space<smem>>
    %c0_34 = arith.constant 0 : index
    %c0_35 = arith.constant 0 : index
    %c0_36 = arith.constant 0 : index
    %161 = vector.load %arg6[%c0_34, %c0_35, %c0_36] : memref<2x4x256xf32, #tpu.memory_space<vmem>>, vector<2x4x256xf32>
    %162 = vector.broadcast %159 : f32 to vector<2x4x256xf32>
    %163 = arith.subf %161, %162 : vector<2x4x256xf32>
    %164 = arith.mulf %163, %163 : vector<2x4x256xf32>
    %cst_37 = arith.constant 0.000000e+00 : f32
    %165 = vector.broadcast %cst_37 : f32 to vector<2x4x256xf32>
    %166 = arith.subf %165, %164 : vector<2x4x256xf32>
    %167 = vector.broadcast %160 : f32 to vector<2x4x256xf32>
    %168 = arith.mulf %166, %167 : vector<2x4x256xf32>
    %169 = math.exp %168 : vector<2x4x256xf32>
    %cst_38 = arith.constant dense<0.000000e+00> : vector<2x256xf32>
    %170 = vector.multi_reduction <add>, %169, %cst_38 [1] : vector<2x4x256xf32> to vector<2x256xf32>
    %cst_39 = arith.constant 2.500000e-01 : f32
    %171 = vector.broadcast %cst_39 : f32 to vector<2x256xf32>
    %172 = arith.mulf %170, %171 : vector<2x256xf32>
    %c27 = arith.constant 27 : index
    %173 = memref.load %arg3[%c27] : memref<36xf32, #tpu.memory_space<smem>>
    %174 = vector.broadcast %173 : f32 to vector<2x256xf32>
    %175 = arith.mulf %172, %174 : vector<2x256xf32>
    %176 = arith.addf %126, %175 : vector<2x256xf32>
    %c28 = arith.constant 28 : index
    %177 = memref.load %arg3[%c28] : memref<36xf32, #tpu.memory_space<smem>>
    %178 = vector.broadcast %177 : f32 to vector<2x256xf32>
    %179 = arith.mulf %172, %178 : vector<2x256xf32>
    %180 = arith.addf %130, %179 : vector<2x256xf32>
    %c29 = arith.constant 29 : index
    %181 = memref.load %arg3[%c29] : memref<36xf32, #tpu.memory_space<smem>>
    %182 = vector.broadcast %181 : f32 to vector<2x256xf32>
    %183 = arith.mulf %172, %182 : vector<2x256xf32>
    %184 = arith.addf %134, %183 : vector<2x256xf32>
    %c30 = arith.constant 30 : index
    %185 = memref.load %arg3[%c30] : memref<36xf32, #tpu.memory_space<smem>>
    %186 = vector.broadcast %185 : f32 to vector<2x256xf32>
    %187 = arith.mulf %172, %186 : vector<2x256xf32>
    %188 = arith.addf %138, %187 : vector<2x256xf32>
    %c31 = arith.constant 31 : index
    %189 = memref.load %arg3[%c31] : memref<36xf32, #tpu.memory_space<smem>>
    %190 = vector.broadcast %189 : f32 to vector<2x256xf32>
    %191 = arith.mulf %172, %190 : vector<2x256xf32>
    %192 = arith.addf %142, %191 : vector<2x256xf32>
    %c32 = arith.constant 32 : index
    %193 = memref.load %arg3[%c32] : memref<36xf32, #tpu.memory_space<smem>>
    %194 = vector.broadcast %193 : f32 to vector<2x256xf32>
    %195 = arith.mulf %172, %194 : vector<2x256xf32>
    %196 = arith.addf %146, %195 : vector<2x256xf32>
    %c33 = arith.constant 33 : index
    %197 = memref.load %arg3[%c33] : memref<36xf32, #tpu.memory_space<smem>>
    %198 = vector.broadcast %197 : f32 to vector<2x256xf32>
    %199 = arith.mulf %172, %198 : vector<2x256xf32>
    %200 = arith.addf %150, %199 : vector<2x256xf32>
    %c34 = arith.constant 34 : index
    %201 = memref.load %arg3[%c34] : memref<36xf32, #tpu.memory_space<smem>>
    %202 = vector.broadcast %201 : f32 to vector<2x256xf32>
    %203 = arith.mulf %172, %202 : vector<2x256xf32>
    %204 = arith.addf %154, %203 : vector<2x256xf32>
    %c35 = arith.constant 35 : index
    %205 = memref.load %arg3[%c35] : memref<36xf32, #tpu.memory_space<smem>>
    %206 = vector.broadcast %205 : f32 to vector<2x256xf32>
    %207 = arith.mulf %172, %206 : vector<2x256xf32>
    %208 = arith.addf %158, %207 : vector<2x256xf32>
    %cst_40 = arith.constant 0.000000e+00 : f32
    %209 = vector.broadcast %cst_40 : f32 to vector<2x256xf32>
    %c17_i32 = arith.constant 17 : i32
    %210 = tpu.dynamic_rotate %176 by %c17_i32 dim 1 : vector<2x256xf32>, i32 -> vector<2x256xf32>
    %c0_41 = arith.constant 0 : index
    %c0_42 = arith.constant 0 : index
    %211 = vector.load %arg5[%c0_41, %c0_42] : memref<9x256xf32, #tpu.memory_space<vmem>>, vector<1x256xf32>
    %212 = vector.broadcast %211 : vector<1x256xf32> to vector<2x256xf32>
    %213 = arith.mulf %210, %212 : vector<2x256xf32>
    %214 = arith.addf %209, %213 : vector<2x256xf32>
    %c16_i32 = arith.constant 16 : i32
    %215 = tpu.dynamic_rotate %180 by %c16_i32 dim 1 : vector<2x256xf32>, i32 -> vector<2x256xf32>
    %c1_43 = arith.constant 1 : index
    %c0_44 = arith.constant 0 : index
    %216 = vector.load %arg5[%c1_43, %c0_44] : memref<9x256xf32, #tpu.memory_space<vmem>>, vector<1x256xf32>
    %217 = vector.broadcast %216 : vector<1x256xf32> to vector<2x256xf32>
    %218 = arith.mulf %215, %217 : vector<2x256xf32>
    %219 = arith.addf %214, %218 : vector<2x256xf32>
    %c15_i32 = arith.constant 15 : i32
    %220 = tpu.dynamic_rotate %184 by %c15_i32 dim 1 : vector<2x256xf32>, i32 -> vector<2x256xf32>
    %c2_45 = arith.constant 2 : index
    %c0_46 = arith.constant 0 : index
    %221 = vector.load %arg5[%c2_45, %c0_46] : memref<9x256xf32, #tpu.memory_space<vmem>>, vector<1x256xf32>
    %222 = vector.broadcast %221 : vector<1x256xf32> to vector<2x256xf32>
    %223 = arith.mulf %220, %222 : vector<2x256xf32>
    %224 = arith.addf %219, %223 : vector<2x256xf32>
    %c1_i32 = arith.constant 1 : i32
    %225 = tpu.dynamic_rotate %188 by %c1_i32 dim 1 : vector<2x256xf32>, i32 -> vector<2x256xf32>
    %c3_47 = arith.constant 3 : index
    %c0_48 = arith.constant 0 : index
    %226 = vector.load %arg5[%c3_47, %c0_48] : memref<9x256xf32, #tpu.memory_space<vmem>>, vector<1x256xf32>
    %227 = vector.broadcast %226 : vector<1x256xf32> to vector<2x256xf32>
    %228 = arith.mulf %225, %227 : vector<2x256xf32>
    %229 = arith.addf %224, %228 : vector<2x256xf32>
    %c4_49 = arith.constant 4 : index
    %c0_50 = arith.constant 0 : index
    %230 = vector.load %arg5[%c4_49, %c0_50] : memref<9x256xf32, #tpu.memory_space<vmem>>, vector<1x256xf32>
    %231 = vector.broadcast %230 : vector<1x256xf32> to vector<2x256xf32>
    %232 = arith.mulf %192, %231 : vector<2x256xf32>
    %233 = arith.addf %229, %232 : vector<2x256xf32>
    %c255_i32 = arith.constant 255 : i32
    %234 = tpu.dynamic_rotate %196 by %c255_i32 dim 1 : vector<2x256xf32>, i32 -> vector<2x256xf32>
    %c5_51 = arith.constant 5 : index
    %c0_52 = arith.constant 0 : index
    %235 = vector.load %arg5[%c5_51, %c0_52] : memref<9x256xf32, #tpu.memory_space<vmem>>, vector<1x256xf32>
    %236 = vector.broadcast %235 : vector<1x256xf32> to vector<2x256xf32>
    %237 = arith.mulf %234, %236 : vector<2x256xf32>
    %238 = arith.addf %233, %237 : vector<2x256xf32>
    %c241_i32 = arith.constant 241 : i32
    %239 = tpu.dynamic_rotate %200 by %c241_i32 dim 1 : vector<2x256xf32>, i32 -> vector<2x256xf32>
    %c6_53 = arith.constant 6 : index
    %c0_54 = arith.constant 0 : index
    %240 = vector.load %arg5[%c6_53, %c0_54] : memref<9x256xf32, #tpu.memory_space<vmem>>, vector<1x256xf32>
    %241 = vector.broadcast %240 : vector<1x256xf32> to vector<2x256xf32>
    %242 = arith.mulf %239, %241 : vector<2x256xf32>
    %243 = arith.addf %238, %242 : vector<2x256xf32>
    %c240_i32 = arith.constant 240 : i32
    %244 = tpu.dynamic_rotate %204 by %c240_i32 dim 1 : vector<2x256xf32>, i32 -> vector<2x256xf32>
    %c7_55 = arith.constant 7 : index
    %c0_56 = arith.constant 0 : index
    %245 = vector.load %arg5[%c7_55, %c0_56] : memref<9x256xf32, #tpu.memory_space<vmem>>, vector<1x256xf32>
    %246 = vector.broadcast %245 : vector<1x256xf32> to vector<2x256xf32>
    %247 = arith.mulf %244, %246 : vector<2x256xf32>
    %248 = arith.addf %243, %247 : vector<2x256xf32>
    %c239_i32 = arith.constant 239 : i32
    %249 = tpu.dynamic_rotate %208 by %c239_i32 dim 1 : vector<2x256xf32>, i32 -> vector<2x256xf32>
    %c8_57 = arith.constant 8 : index
    %c0_58 = arith.constant 0 : index
    %250 = vector.load %arg5[%c8_57, %c0_58] : memref<9x256xf32, #tpu.memory_space<vmem>>, vector<1x256xf32>
    %251 = vector.broadcast %250 : vector<1x256xf32> to vector<2x256xf32>
    %252 = arith.mulf %249, %251 : vector<2x256xf32>
    %253 = arith.addf %248, %252 : vector<2x256xf32>
    %c0_59 = arith.constant 0 : index
    %254 = memref.load %arg4[%c0_59] : memref<3xf32, #tpu.memory_space<smem>>
    %c1_60 = arith.constant 1 : index
    %255 = memref.load %arg4[%c1_60] : memref<3xf32, #tpu.memory_space<smem>>
    %c2_61 = arith.constant 2 : index
    %256 = memref.load %arg4[%c2_61] : memref<3xf32, #tpu.memory_space<smem>>
    %257 = vector.broadcast %254 : f32 to vector<2x256xf32>
    %258 = arith.addf %253, %257 : vector<2x256xf32>
    %259 = vector.broadcast %255 : f32 to vector<2x256xf32>
    %260 = arith.mulf %258, %259 : vector<2x256xf32>
    %261 = vector.broadcast %256 : f32 to vector<2x256xf32>
    %262 = arith.addf %260, %261 : vector<2x256xf32>
    %263 = arith.negf %262 : vector<2x256xf32>
    %264 = math.exp %263 : vector<2x256xf32>
    %cst_62 = arith.constant 1.000000e+00 : f32
    %265 = vector.broadcast %cst_62 : f32 to vector<2x256xf32>
    %266 = arith.addf %265, %264 : vector<2x256xf32>
    %267 = arith.divf %265, %266 : vector<2x256xf32>
    %cst_63 = arith.constant 1.000000e+00 : f32
    %268 = vector.broadcast %cst_63 : f32 to vector<2x256xf32>
    %269 = arith.addf %267, %268 : vector<2x256xf32>
    %270 = vector.shape_cast %269 : vector<2x256xf32> to vector<2x1x256xf32>
    %c0_64 = arith.constant 0 : index
    %c0_65 = arith.constant 0 : index
    %c0_66 = arith.constant 0 : index
    %271 = vector.load %arg6[%c0_64, %c0_65, %c0_66] : memref<2x4x256xf32, #tpu.memory_space<vmem>>, vector<2x4x256xf32>
    %272 = vector.broadcast %270 : vector<2x1x256xf32> to vector<2x4x256xf32>
    %273 = arith.mulf %271, %272 : vector<2x4x256xf32>
    %c0_67 = arith.constant 0 : index
    %c0_68 = arith.constant 0 : index
    %c0_69 = arith.constant 0 : index
    %274 = vector.load %arg7[%c0_67, %c0_68, %c0_69] : memref<2x4x256xf32, #tpu.memory_space<vmem>>, vector<2x4x256xf32>
    tpu.vector_store %arg7[%c0_67, %c0_68, %c0_69], %273 {strides = array<i32>} : memref<2x4x256xf32, #tpu.memory_space<vmem>>, vector<2x4x256xf32>,
    return
  }
  func.func @transform_0(%arg0: i32) -> i32 {
    %c0_i32 = arith.constant 0 : i32
    %c0_i32_0 = arith.constant 0 : i32
    return %c0_i32 : i32
  }
  func.func @transform_1(%arg0: i32) -> i32 {
    %c0_i32 = arith.constant 0 : i32
    %c0_i32_0 = arith.constant 0 : i32
    return %c0_i32 : i32
  }
  func.func @transform_2(%arg0: i32) -> i32 {
    %c0_i32 = arith.constant 0 : i32
    %c0_i32_0 = arith.constant 0 : i32
    return %c0_i32 : i32
  }
  func.func @transform_3(%arg0: i32) -> i32 {
    %c0_i32 = arith.constant 0 : i32
    %c0_i32_0 = arith.constant 0 : i32
    return %c0_i32 : i32
  }
  func.func @transform_4(%arg0: i32) -> (i32, i32) {
    %c0_i32 = arith.constant 0 : i32
    %c0_i32_0 = arith.constant 0 : i32
    %c0_i32_1 = arith.constant 0 : i32
    return %c0_i32, %c0_i32_0 : i32, i32
  }
  func.func @transform_5(%arg0: i32) -> (i32, i32, i32) {
    %c0_i32 = arith.constant 0 : i32
    %c0_i32_0 = arith.constant 0 : i32
    %c0_i32_1 = arith.constant 0 : i32
    return %arg0, %c0_i32, %c0_i32_0 : i32, i32, i32
  }
  func.func @transform_6(%arg0: i32) -> (i32, i32, i32) {
    %c0_i32 = arith.constant 0 : i32
    %c0_i32_0 = arith.constant 0 : i32
    %c0_i32_1 = arith.constant 0 : i32
    return %arg0, %c0_i32, %c0_i32_0 : i32, i32, i32
  }
}

</mosaic_0001>

<llo_original>
// kernel: tpu_custom_call.1
$region0: #{tpu_custom_call.1}
  #allocation0 [shape = 'u32[]', space=smem, size = 0x4, offset = 0x4, fixed_abs, tag = 'smem constant byte address 0x4 - core index']
  #allocation1 [shape = 'u32[144,128]{1,0:T(1,128)}', space=vmem, size = 0x12000, scoped, tag = 'internal scratch']
  %s0 = inlined_call_operand.hbm [shape: f32[4], index: 0, kind: input, shape index: {}]
  %s1 = inlined_call_operand.vmem [shape: f32[4], index: 1, kind: input, shape index: {}]
  %s2 = inlined_call_operand.vmem [shape: f32[36], index: 2, kind: input, shape index: {}]
  %s3 = inlined_call_operand.hbm [shape: f32[3], index: 3, kind: input, shape index: {}]
  %s4 = inlined_call_operand.hbm [shape: f32[9,256], index: 4, kind: input, shape index: {}]
  %s5 = inlined_call_operand.vmem [shape: f32[2,4,256], index: 5, kind: input, shape index: {}]
  %s6 = inlined_call_operand.hbm [shape: f32[2,4,256], index: 6, kind: output, shape index: {}]
  %s7 = sld [smem:[#allocation0]]
  $region54: #{tpu_custom_call.1} parent=0
    _
  %s9 = ssub.s32 1, %s7
  %s10 = scalar_select 0, %s9, %s7
  $region1: #{tpu_custom_call.1} parent=0
    #allocation2 [shape = 'u8[512]{0}', space=smem, size = 0x200, scoped, tag = 'input window, operand 0, single buffered']
    #allocation3 [shape = 's32[1]{0}', space=sflag, size = 0x4, scoped, tag = 'scoped memory for tpu_custom_call.1']
    #allocation4 [shape = 's32[1]{0}', space=sflag, size = 0x4, scoped, tag = 'scoped memory for tpu_custom_call.1']
    #allocation5 [shape = 's32[1]{0}', space=sflag, size = 0x4, scoped, tag = 'scoped memory for tpu_custom_call.1']
    #allocation6 [shape = 's32[1]{0}', space=sflag, size = 0x4, scoped, tag = 'scoped memory for tpu_custom_call.1']
    #allocation7 [shape = 'u8[512]{0}', space=smem, size = 0x200, scoped, tag = 'input window, operand 1, single buffered']
    #allocation8 [shape = 'u8[512]{0}', space=smem, size = 0x200, scoped, tag = 'input window, operand 2, single buffered']
    #allocation9 [shape = 's32[1]{0}', space=sflag, size = 0x4, scoped, tag = 'scoped memory for tpu_custom_call.1']
    #allocation10 [shape = 'u8[512]{0}', space=smem, size = 0x200, scoped, tag = 'input window, operand 3, single buffered']
    #allocation11 [shape = 's32[1]{0}', space=sflag, size = 0x4, scoped, tag = 'scoped memory for tpu_custom_call.1']
    #allocation12 [shape = 'u8[16384]{0}', space=vmem, size = 0x4000, scoped, tag = 'input window, operand 4, single buffered']
    #allocation13 [shape = 'u8[8192]{0}', space=vmem, size = 0x2000, scoped, tag = 'output window, operand 0, single buffered']
    %11 = vsyncpa [#allocation5], 0
    %12 = vsyncpa [#allocation6], 0
    %13 = vsyncpa [#allocation9], 0
    %14 = vsyncpa [#allocation11], 0
    %15 = vsyncpa [#allocation3], 0
    %16 = vsyncpa [#allocation4], 0
    // Predicated region
    $region2: #{tpu_custom_call.1} parent=1 // pred_check
      _
    $region3: #{tpu_custom_call.1} parent=1 // pred_check_branch
      %18 = sbr.rel (0) target = $region5
    $region4: #{tpu_custom_call.1} parent=1 // pred_region
      %s20 = ssub.s32 16, 16
      %21 = vsyncadd [#allocation5], %s20
      %24 = dma.hbm_to_smem %s0, 16, [#allocation2], [#allocation5]
    $region5: #{tpu_custom_call.1} parent=1 // pred_fallthru
      _
    // Predicated region
    $region6: #{tpu_custom_call.1} parent=1 // pred_check
      _
    $region7: #{tpu_custom_call.1} parent=1 // pred_check_branch
      %26 = sbr.rel (0) target = $region9
    $region8: #{tpu_custom_call.1} parent=1 // pred_region
      %s28 = ssub.s32 16, 16
      %29 = vsyncadd [#allocation6], %s28
      %s31 = sshll.u32 %s1, 4
      %s32 = int_to_ptr.vmem [resolvable:$true] %s31
      %34 = dma.vmem_to_smem %s32, 16, [#allocation7], [#allocation6]
    $region9: #{tpu_custom_call.1} parent=1 // pred_fallthru
      _
    // Predicated region
    $region10: #{tpu_custom_call.1} parent=1 // pred_check
      _
    $region11: #{tpu_custom_call.1} parent=1 // pred_check_branch
      %36 = sbr.rel (0) target = $region13
    $region12: #{tpu_custom_call.1} parent=1 // pred_region
      %s38 = ssub.s32 16, 16
      %39 = vsyncadd [#allocation9], %s38
      %s41 = sshll.u32 %s2, 4
      %s42 = int_to_ptr.vmem [resolvable:$true] %s41
      %44 = dma.vmem_to_smem %s42, 16, [#allocation8], [#allocation9]
    $region13: #{tpu_custom_call.1} parent=1 // pred_fallthru
      _
    // Predicated region
    $region14: #{tpu_custom_call.1} parent=1 // pred_check
      _
    $region15: #{tpu_custom_call.1} parent=1 // pred_check_branch
      %46 = sbr.rel (0) target = $region17
    $region16: #{tpu_custom_call.1} parent=1 // pred_region
      %s48 = ssub.s32 16, 16
      %49 = vsyncadd [#allocation11], %s48
      %52 = dma.hbm_to_smem %s3, 16, [#allocation10], [#allocation11]
    $region17: #{tpu_custom_call.1} parent=1 // pred_fallthru
      _
    // Predicated region
    $region18: #{tpu_custom_call.1} parent=1 // pred_check
      _
    $region19: #{tpu_custom_call.1} parent=1 // pred_check_branch
      %54 = sbr.rel (0) target = $region21
    $region20: #{tpu_custom_call.1} parent=1 // pred_region
      %s56 = ssub.s32 512, 512
      %57 = vsyncadd [#allocation3], %s56
      %s58 = sshll.u32 [#allocation12], 4
      %s59 = int_to_ptr.vmem [resolvable:$true] %s58
      %64 = dma.hbm_to_vmem [thread:$0]  %s4, 512, %s59, [#allocation3], 256, 256, 16
    $region21: #{tpu_custom_call.1} parent=1 // pred_fallthru
      _
    // Predicated region
    $region22: #{tpu_custom_call.1} parent=1 // pred_check
      _
    $region23: #{tpu_custom_call.1} parent=1 // pred_check_branch
      %66 = sbr.rel (0) target = $region25
    $region24: #{tpu_custom_call.1} parent=1 // pred_region
      _
    $region25: #{tpu_custom_call.1} parent=1 // pred_fallthru
      _
    // Predicated region
    $region26: #{tpu_custom_call.1} parent=1 // pred_check
      _
    $region27: #{tpu_custom_call.1} parent=1 // pred_check_branch
      %68 = sbr.rel (0) target = $region29
    $region28: #{tpu_custom_call.1} parent=1 // pred_region
      %69 = dma.done [#allocation5], 16
    $region29: #{tpu_custom_call.1} parent=1 // pred_fallthru
      _
    // Predicated region
    $region30: #{tpu_custom_call.1} parent=1 // pred_check
      _
    $region31: #{tpu_custom_call.1} parent=1 // pred_check_branch
      %71 = sbr.rel (0) target = $region33
    $region32: #{tpu_custom_call.1} parent=1 // pred_region
      %72 = dma.done [#allocation6], 16
    $region33: #{tpu_custom_call.1} parent=1 // pred_fallthru
      _
    // Predicated region
    $region34: #{tpu_custom_call.1} parent=1 // pred_check
      _
    $region35: #{tpu_custom_call.1} parent=1 // pred_check_branch
      %74 = sbr.rel (0) target = $region37
    $region36: #{tpu_custom_call.1} parent=1 // pred_region
      %75 = dma.done [#allocation9], 16
    $region37: #{tpu_custom_call.1} parent=1 // pred_fallthru
      _
    // Predicated region
    $region38: #{tpu_custom_call.1} parent=1 // pred_check
      _
    $region39: #{tpu_custom_call.1} parent=1 // pred_check_branch
      %77 = sbr.rel (0) target = $region41
    $region40: #{tpu_custom_call.1} parent=1 // pred_region
      %78 = dma.done [#allocation11], 16
    $region41: #{tpu_custom_call.1} parent=1 // pred_fallthru
      _
    // Predicated region
    $region42: #{tpu_custom_call.1} parent=1 // pred_check
      _
    $region43: #{tpu_custom_call.1} parent=1 // pred_check_branch
      %80 = sbr.rel (0) target = $region45
    $region44: #{tpu_custom_call.1} parent=1 // pred_region
      %81 = dma.done [#allocation3], 512
    $region45: #{tpu_custom_call.1} parent=1 // pred_fallthru
      _
    %82 = sfence
    %s83 = sld [smem:[#allocation2]]
    %s84 = sld [smem:[#allocation7]]
    %v85 = vld [vmem:[%s5] sm:$0xff]
    %v86 = vld [vmem:[%s5 + $0x8] sm:$0xff]
    %v87 = vstv %s83
    %v88 = vsub.f32 %v85, %v87
    %v89 = vsub.f32 %v86, %v87
    %v90 = vmul.f32 %v88, %v88
    %v91 = vmul.f32 %v89, %v89
    %v92 = vsub.f32 0.0, %v90
    %v93 = vsub.f32 0.0, %v91
    %v94 = vstv %s84
    %v95 = vmul.f32 %v92, %v94
    %v96 = vmul.f32 %v93, %v94
    %v97 = vmul.f32 %v95, 1.442695
    %v98 = vpow.pop %v97
    %v99 = vmul.f32 %v96, 1.442695
    %v100 = vpow.pop %v99
    %v103 = vcombine.high %v98, %v98
    %v104 = vcombine.high %v100, %v100
    %vm107 = vcmask 1043456
    %v108 = vsel %vm107, %v98, 0.0
    %v109 = vrot.slane %v108, 4
    %v110 = vadd.f32 %v108, %v109
    %v111 = vrot.slane %v110, 2
    %v112 = vadd.f32 %v110, %v111
    %v113 = vrot.slane %v112, 1
    %v114 = vadd.f32 %v112, %v113
    %v115 = vsel %vm107, %v103, 0.0
    %v116 = vrot.slane %v115, 4
    %v117 = vadd.f32 %v115, %v116
    %v118 = vrot.slane %v117, 2
    %v119 = vadd.f32 %v117, %v118
    %v120 = vrot.slane %v119, 1
    %v121 = vadd.f32 %v119, %v120
    %v122 = vsel %vm107, %v100, 0.0
    %v123 = vrot.slane %v122, 4
    %v124 = vadd.f32 %v122, %v123
    %v125 = vrot.slane %v124, 2
    %v126 = vadd.f32 %v124, %v125
    %v127 = vrot.slane %v126, 1
    %v128 = vadd.f32 %v126, %v127
    %v129 = vsel %vm107, %v104, 0.0
    %v130 = vrot.slane %v129, 4
    %v131 = vadd.f32 %v129, %v130
    %v132 = vrot.slane %v131, 2
    %v133 = vadd.f32 %v131, %v132
    %v134 = vrot.slane %v133, 1
    %v135 = vadd.f32 %v133, %v134
    %v136 = vmul.f32 %v114, 0.25
    %v137 = vmul.f32 %v121, 0.25
    %v138 = vmul.f32 %v128, 0.25
    %v139 = vmul.f32 %v135, 0.25
    %s140 = sld [smem:[#allocation8]]
    %v141 = vstv %s140
    %v142 = vmul.f32 %v136, %v141
    %v143 = vmul.f32 %v137, %v141
    %v144 = vmul.f32 %v138, %v141
    %v145 = vmul.f32 %v139, %v141
    %v146 = vadd.f32 %v142, 0.0
    %v147 = vadd.f32 %v143, 0.0
    %v148 = vadd.f32 %v144, 0.0
    %v149 = vadd.f32 %v145, 0.0
    %s150 = sld [smem:[#allocation8 + $0x1]]
    %v151 = vstv %s150
    %v152 = vmul.f32 %v136, %v151
    %v153 = vmul.f32 %v137, %v151
    %v154 = vmul.f32 %v138, %v151
    %v155 = vmul.f32 %v139, %v151
    %v156 = vadd.f32 %v152, 0.0
    %v157 = vadd.f32 %v153, 0.0
    %v158 = vadd.f32 %v154, 0.0
    %v159 = vadd.f32 %v155, 0.0
    %s160 = sld [smem:[#allocation8 + $0x2]]
    %v161 = vstv %s160
    %v162 = vmul.f32 %v136, %v161
    %v163 = vmul.f32 %v137, %v161
    %v164 = vmul.f32 %v138, %v161
    %v165 = vmul.f32 %v139, %v161
    %v166 = vadd.f32 %v162, 0.0
    %v167 = vadd.f32 %v163, 0.0
    %v168 = vadd.f32 %v164, 0.0
    %v169 = vadd.f32 %v165, 0.0
    %s170 = sld [smem:[#allocation8 + $0x3]]
    %v171 = vstv %s170
    %v172 = vmul.f32 %v136, %v171
    %v173 = vmul.f32 %v137, %v171
    %v174 = vmul.f32 %v138, %v171
    %v175 = vmul.f32 %v139, %v171
    %v176 = vadd.f32 %v172, 0.0
    %v177 = vadd.f32 %v173, 0.0
    %v178 = vadd.f32 %v174, 0.0
    %v179 = vadd.f32 %v175, 0.0
    %s180 = sld [smem:[#allocation8 + $0x4]]
    %v181 = vstv %s180
    %v182 = vmul.f32 %v136, %v181
    %v183 = vmul.f32 %v137, %v181
    %v184 = vmul.f32 %v138, %v181
    %v185 = vmul.f32 %v139, %v181
    %v186 = vadd.f32 %v182, 0.0
    %v187 = vadd.f32 %v183, 0.0
    %v188 = vadd.f32 %v184, 0.0
    %v189 = vadd.f32 %v185, 0.0
    %s190 = sld [smem:[#allocation8 + $0x5]]
    %v191 = vstv %s190
    %v192 = vmul.f32 %v136, %v191
    %v193 = vmul.f32 %v137, %v191
    %v194 = vmul.f32 %v138, %v191
    %v195 = vmul.f32 %v139, %v191
    %v196 = vadd.f32 %v192, 0.0
    %v197 = vadd.f32 %v193, 0.0
    %v198 = vadd.f32 %v194, 0.0
    %v199 = vadd.f32 %v195, 0.0
    %s200 = sld [smem:[#allocation8 + $0x6]]
    %v201 = vstv %s200
    %v202 = vmul.f32 %v136, %v201
    %v203 = vmul.f32 %v137, %v201
    %v204 = vmul.f32 %v138, %v201
    %v205 = vmul.f32 %v139, %v201
    %v206 = vadd.f32 %v202, 0.0
    %v207 = vadd.f32 %v203, 0.0
    %v208 = vadd.f32 %v204, 0.0
    %v209 = vadd.f32 %v205, 0.0
    %s210 = sld [smem:[#allocation8 + $0x7]]
    %v211 = vstv %s210
    %v212 = vmul.f32 %v136, %v211
    %v213 = vmul.f32 %v137, %v211
    %v214 = vmul.f32 %v138, %v211
    %v215 = vmul.f32 %v139, %v211
    %v216 = vadd.f32 %v212, 0.0
    %v217 = vadd.f32 %v213, 0.0
    %v218 = vadd.f32 %v214, 0.0
    %v219 = vadd.f32 %v215, 0.0
    %s220 = sld [smem:[#allocation8 + $0x8]]
    %v221 = vstv %s220
    %v222 = vmul.f32 %v136, %v221
    %v223 = vmul.f32 %v137, %v221
    %v224 = vmul.f32 %v138, %v221
    %v225 = vmul.f32 %v139, %v221
    %v226 = vadd.f32 %v222, 0.0
    %v227 = vadd.f32 %v223, 0.0
    %v228 = vadd.f32 %v224, 0.0
    %v229 = vadd.f32 %v225, 0.0
    %s230 = sld [smem:[#allocation2 + $0x1]]
    %s231 = sld [smem:[#allocation7 + $0x1]]
    %v232 = vstv %s230
    %v233 = vsub.f32 %v85, %v232
    %v234 = vsub.f32 %v86, %v232
    %v235 = vmul.f32 %v233, %v233
    %v236 = vmul.f32 %v234, %v234
    %v237 = vsub.f32 0.0, %v235
    %v238 = vsub.f32 0.0, %v236
    %v239 = vstv %s231
    %v240 = vmul.f32 %v237, %v239
    %v241 = vmul.f32 %v238, %v239
    %v242 = vmul.f32 %v240, 1.442695
    %v243 = vpow.pop %v242
    %v244 = vmul.f32 %v241, 1.442695
    %v245 = vpow.pop %v244
    %v248 = vcombine.high %v243, %v243
    %v249 = vcombine.high %v245, %v245
    %v252 = vsel %vm107, %v243, 0.0
    %v253 = vrot.slane %v252, 4
    %v254 = vadd.f32 %v252, %v253
    %v255 = vrot.slane %v254, 2
    %v256 = vadd.f32 %v254, %v255
    %v257 = vrot.slane %v256, 1
    %v258 = vadd.f32 %v256, %v257
    %v259 = vsel %vm107, %v248, 0.0
    %v260 = vrot.slane %v259, 4
    %v261 = vadd.f32 %v259, %v260
    %v262 = vrot.slane %v261, 2
    %v263 = vadd.f32 %v261, %v262
    %v264 = vrot.slane %v263, 1
    %v265 = vadd.f32 %v263, %v264
    %v266 = vsel %vm107, %v245, 0.0
    %v267 = vrot.slane %v266, 4
    %v268 = vadd.f32 %v266, %v267
    %v269 = vrot.slane %v268, 2
    %v270 = vadd.f32 %v268, %v269
    %v271 = vrot.slane %v270, 1
    %v272 = vadd.f32 %v270, %v271
    %v273 = vsel %vm107, %v249, 0.0
    %v274 = vrot.slane %v273, 4
    %v275 = vadd.f32 %v273, %v274
    %v276 = vrot.slane %v275, 2
    %v277 = vadd.f32 %v275, %v276
    %v278 = vrot.slane %v277, 1
    %v279 = vadd.f32 %v277, %v278
    %v280 = vmul.f32 %v258, 0.25
    %v281 = vmul.f32 %v265, 0.25
    %v282 = vmul.f32 %v272, 0.25
    %v283 = vmul.f32 %v279, 0.25
    %s284 = sld [smem:[#allocation8 + $0x9]]
    %v285 = vstv %s284
    %v286 = vmul.f32 %v280, %v285
    %v287 = vmul.f32 %v281, %v285
    %v288 = vmul.f32 %v282, %v285
    %v289 = vmul.f32 %v283, %v285
    %v290 = vadd.f32 %v146, %v286
    %v291 = vadd.f32 %v147, %v287
    %v292 = vadd.f32 %v148, %v288
    %v293 = vadd.f32 %v149, %v289
    %s294 = sld [smem:[#allocation8 + $0xa]]
    %v295 = vstv %s294
    %v296 = vmul.f32 %v280, %v295
    %v297 = vmul.f32 %v281, %v295
    %v298 = vmul.f32 %v282, %v295
    %v299 = vmul.f32 %v283, %v295
    %v300 = vadd.f32 %v156, %v296
    %v301 = vadd.f32 %v157, %v297
    %v302 = vadd.f32 %v158, %v298
    %v303 = vadd.f32 %v159, %v299
    %s304 = sld [smem:[#allocation8 + $0xb]]
    %v305 = vstv %s304
    %v306 = vmul.f32 %v280, %v305
    %v307 = vmul.f32 %v281, %v305
    %v308 = vmul.f32 %v282, %v305
    %v309 = vmul.f32 %v283, %v305
    %v310 = vadd.f32 %v166, %v306
    %v311 = vadd.f32 %v167, %v307
    %v312 = vadd.f32 %v168, %v308
    %v313 = vadd.f32 %v169, %v309
    %s314 = sld [smem:[#allocation8 + $0xc]]
    %v315 = vstv %s314
    %v316 = vmul.f32 %v280, %v315
    %v317 = vmul.f32 %v281, %v315
    %v318 = vmul.f32 %v282, %v315
    %v319 = vmul.f32 %v283, %v315
    %v320 = vadd.f32 %v176, %v316
    %v321 = vadd.f32 %v177, %v317
    %v322 = vadd.f32 %v178, %v318
    %v323 = vadd.f32 %v179, %v319
    %s324 = sld [smem:[#allocation8 + $0xd]]
    %v325 = vstv %s324
    %v326 = vmul.f32 %v280, %v325
    %v327 = vmul.f32 %v281, %v325
    %v328 = vmul.f32 %v282, %v325
    %v329 = vmul.f32 %v283, %v325
    %v330 = vadd.f32 %v186, %v326
    %v331 = vadd.f32 %v187, %v327
    %v332 = vadd.f32 %v188, %v328
    %v333 = vadd.f32 %v189, %v329
    %s334 = sld [smem:[#allocation8 + $0xe]]
    %v335 = vstv %s334
    %v336 = vmul.f32 %v280, %v335
    %v337 = vmul.f32 %v281, %v335
    %v338 = vmul.f32 %v282, %v335
    %v339 = vmul.f32 %v283, %v335
    %v340 = vadd.f32 %v196, %v336
    %v341 = vadd.f32 %v197, %v337
    %v342 = vadd.f32 %v198, %v338
    %v343 = vadd.f32 %v199, %v339
    %s344 = sld [smem:[#allocation8 + $0xf]]
    %v345 = vstv %s344
    %v346 = vmul.f32 %v280, %v345
    %v347 = vmul.f32 %v281, %v345
    %v348 = vmul.f32 %v282, %v345
    %v349 = vmul.f32 %v283, %v345
    %v350 = vadd.f32 %v206, %v346
    %v351 = vadd.f32 %v207, %v347
    %v352 = vadd.f32 %v208, %v348
    %v353 = vadd.f32 %v209, %v349
    %s354 = sld [smem:[#allocation8 + $0x10]]
    %v355 = vstv %s354
    %v356 = vmul.f32 %v280, %v355
    %v357 = vmul.f32 %v281, %v355
    %v358 = vmul.f32 %v282, %v355
    %v359 = vmul.f32 %v283, %v355
    %v360 = vadd.f32 %v216, %v356
    %v361 = vadd.f32 %v217, %v357
    %v362 = vadd.f32 %v218, %v358
    %v363 = vadd.f32 %v219, %v359
    %s364 = sld [smem:[#allocation8 + $0x11]]
    %v365 = vstv %s364
    %v366 = vmul.f32 %v280, %v365
    %v367 = vmul.f32 %v281, %v365
    %v368 = vmul.f32 %v282, %v365
    %v369 = vmul.f32 %v283, %v365
    %v370 = vadd.f32 %v226, %v366
    %v371 = vadd.f32 %v227, %v367
    %v372 = vadd.f32 %v228, %v368
    %v373 = vadd.f32 %v229, %v369
    %s374 = sld [smem:[#allocation2 + $0x2]]
    %s375 = sld [smem:[#allocation7 + $0x2]]
    %v376 = vstv %s374
    %v377 = vsub.f32 %v85, %v376
    %v378 = vsub.f32 %v86, %v376
    %v379 = vmul.f32 %v377, %v377
    %v380 = vmul.f32 %v378, %v378
    %v381 = vsub.f32 0.0, %v379
    %v382 = vsub.f32 0.0, %v380
    %v383 = vstv %s375
    %v384 = vmul.f32 %v381, %v383
    %v385 = vmul.f32 %v382, %v383
    %v386 = vmul.f32 %v384, 1.442695
    %v387 = vpow.pop %v386
    %v388 = vmul.f32 %v385, 1.442695
    %v389 = vpow.pop %v388
    %v392 = vcombine.high %v387, %v387
    %v393 = vcombine.high %v389, %v389
    %v396 = vsel %vm107, %v387, 0.0
    %v397 = vrot.slane %v396, 4
    %v398 = vadd.f32 %v396, %v397
    %v399 = vrot.slane %v398, 2
    %v400 = vadd.f32 %v398, %v399
    %v401 = vrot.slane %v400, 1
    %v402 = vadd.f32 %v400, %v401
    %v403 = vsel %vm107, %v392, 0.0
    %v404 = vrot.slane %v403, 4
    %v405 = vadd.f32 %v403, %v404
    %v406 = vrot.slane %v405, 2
    %v407 = vadd.f32 %v405, %v406
    %v408 = vrot.slane %v407, 1
    %v409 = vadd.f32 %v407, %v408
    %v410 = vsel %vm107, %v389, 0.0
    %v411 = vrot.slane %v410, 4
    %v412 = vadd.f32 %v410, %v411
    %v413 = vrot.slane %v412, 2
    %v414 = vadd.f32 %v412, %v413
    %v415 = vrot.slane %v414, 1
    %v416 = vadd.f32 %v414, %v415
    %v417 = vsel %vm107, %v393, 0.0
    %v418 = vrot.slane %v417, 4
    %v419 = vadd.f32 %v417, %v418
    %v420 = vrot.slane %v419, 2
    %v421 = vadd.f32 %v419, %v420
    %v422 = vrot.slane %v421, 1
    %v423 = vadd.f32 %v421, %v422
    %v424 = vmul.f32 %v402, 0.25
    %v425 = vmul.f32 %v409, 0.25
    %v426 = vmul.f32 %v416, 0.25
    %v427 = vmul.f32 %v423, 0.25
    %s428 = sld [smem:[#allocation8 + $0x12]]
    %v429 = vstv %s428
    %v430 = vmul.f32 %v424, %v429
    %v431 = vmul.f32 %v425, %v429
    %v432 = vmul.f32 %v426, %v429
    %v433 = vmul.f32 %v427, %v429
    %v434 = vadd.f32 %v290, %v430
    %v435 = vadd.f32 %v291, %v431
    %v436 = vadd.f32 %v292, %v432
    %v437 = vadd.f32 %v293, %v433
    %s438 = sld [smem:[#allocation8 + $0x13]]
    %v439 = vstv %s438
    %v440 = vmul.f32 %v424, %v439
    %v441 = vmul.f32 %v425, %v439
    %v442 = vmul.f32 %v426, %v439
    %v443 = vmul.f32 %v427, %v439
    %v444 = vadd.f32 %v300, %v440
    %v445 = vadd.f32 %v301, %v441
    %v446 = vadd.f32 %v302, %v442
    %v447 = vadd.f32 %v303, %v443
    %s448 = sld [smem:[#allocation8 + $0x14]]
    %v449 = vstv %s448
    %v450 = vmul.f32 %v424, %v449
    %v451 = vmul.f32 %v425, %v449
    %v452 = vmul.f32 %v426, %v449
    %v453 = vmul.f32 %v427, %v449
    %v454 = vadd.f32 %v310, %v450
    %v455 = vadd.f32 %v311, %v451
    %v456 = vadd.f32 %v312, %v452
    %v457 = vadd.f32 %v313, %v453
    %s458 = sld [smem:[#allocation8 + $0x15]]
    %v459 = vstv %s458
    %v460 = vmul.f32 %v424, %v459
    %v461 = vmul.f32 %v425, %v459
    %v462 = vmul.f32 %v426, %v459
    %v463 = vmul.f32 %v427, %v459
    %v464 = vadd.f32 %v320, %v460
    %v465 = vadd.f32 %v321, %v461
    %v466 = vadd.f32 %v322, %v462
    %v467 = vadd.f32 %v323, %v463
    %s468 = sld [smem:[#allocation8 + $0x16]]
    %v469 = vstv %s468
    %v470 = vmul.f32 %v424, %v469
    %v471 = vmul.f32 %v425, %v469
    %v472 = vmul.f32 %v426, %v469
    %v473 = vmul.f32 %v427, %v469
    %v474 = vadd.f32 %v330, %v470
    %v475 = vadd.f32 %v331, %v471
    %v476 = vadd.f32 %v332, %v472
    %v477 = vadd.f32 %v333, %v473
    %s478 = sld [smem:[#allocation8 + $0x17]]
    %v479 = vstv %s478
    %v480 = vmul.f32 %v424, %v479
    %v481 = vmul.f32 %v425, %v479
    %v482 = vmul.f32 %v426, %v479
    %v483 = vmul.f32 %v427, %v479
    %v484 = vadd.f32 %v340, %v480
    %v485 = vadd.f32 %v341, %v481
    %v486 = vadd.f32 %v342, %v482
    %v487 = vadd.f32 %v343, %v483
    %s488 = sld [smem:[#allocation8 + $0x18]]
    %v489 = vstv %s488
    %v490 = vmul.f32 %v424, %v489
    %v491 = vmul.f32 %v425, %v489
    %v492 = vmul.f32 %v426, %v489
    %v493 = vmul.f32 %v427, %v489
    %v494 = vadd.f32 %v350, %v490
    %v495 = vadd.f32 %v351, %v491
    %v496 = vadd.f32 %v352, %v492
    %v497 = vadd.f32 %v353, %v493
    %s498 = sld [smem:[#allocation8 + $0x19]]
    %v499 = vstv %s498
    %v500 = vmul.f32 %v424, %v499
    %v501 = vmul.f32 %v425, %v499
    %v502 = vmul.f32 %v426, %v499
    %v503 = vmul.f32 %v427, %v499
    %v504 = vadd.f32 %v360, %v500
    %v505 = vadd.f32 %v361, %v501
    %v506 = vadd.f32 %v362, %v502
    %v507 = vadd.f32 %v363, %v503
    %s508 = sld [smem:[#allocation8 + $0x1a]]
    %v509 = vstv %s508
    %v510 = vmul.f32 %v424, %v509
    %v511 = vmul.f32 %v425, %v509
    %v512 = vmul.f32 %v426, %v509
    %v513 = vmul.f32 %v427, %v509
    %v514 = vadd.f32 %v370, %v510
    %v515 = vadd.f32 %v371, %v511
    %v516 = vadd.f32 %v372, %v512
    %v517 = vadd.f32 %v373, %v513
    %s518 = sld [smem:[#allocation2 + $0x3]]
    %s519 = sld [smem:[#allocation7 + $0x3]]
    %v520 = vstv %s518
    %v521 = vsub.f32 %v85, %v520
    %v522 = vsub.f32 %v86, %v520
    %v523 = vmul.f32 %v521, %v521
    %v524 = vmul.f32 %v522, %v522
    %v525 = vsub.f32 0.0, %v523
    %v526 = vsub.f32 0.0, %v524
    %v527 = vstv %s519
    %v528 = vmul.f32 %v525, %v527
    %v529 = vmul.f32 %v526, %v527
    %v530 = vmul.f32 %v528, 1.442695
    %v531 = vpow.pop %v530
    %v532 = vmul.f32 %v529, 1.442695
    %v533 = vpow.pop %v532
    %v536 = vcombine.high %v531, %v531
    %v537 = vcombine.high %v533, %v533
    %v540 = vsel %vm107, %v531, 0.0
    %v541 = vrot.slane %v540, 4
    %v542 = vadd.f32 %v540, %v541
    %v543 = vrot.slane %v542, 2
    %v544 = vadd.f32 %v542, %v543
    %v545 = vrot.slane %v544, 1
    %v546 = vadd.f32 %v544, %v545
    %v547 = vsel %vm107, %v536, 0.0
    %v548 = vrot.slane %v547, 4
    %v549 = vadd.f32 %v547, %v548
    %v550 = vrot.slane %v549, 2
    %v551 = vadd.f32 %v549, %v550
    %v552 = vrot.slane %v551, 1
    %v553 = vadd.f32 %v551, %v552
    %v554 = vsel %vm107, %v533, 0.0
    %v555 = vrot.slane %v554, 4
    %v556 = vadd.f32 %v554, %v555
    %v557 = vrot.slane %v556, 2
    %v558 = vadd.f32 %v556, %v557
    %v559 = vrot.slane %v558, 1
    %v560 = vadd.f32 %v558, %v559
    %v561 = vsel %vm107, %v537, 0.0
    %v562 = vrot.slane %v561, 4
    %v563 = vadd.f32 %v561, %v562
    %v564 = vrot.slane %v563, 2
    %v565 = vadd.f32 %v563, %v564
    %v566 = vrot.slane %v565, 1
    %v567 = vadd.f32 %v565, %v566
    %v568 = vmul.f32 %v546, 0.25
    %v569 = vmul.f32 %v553, 0.25
    %v570 = vmul.f32 %v560, 0.25
    %v571 = vmul.f32 %v567, 0.25
    %s572 = sld [smem:[#allocation8 + $0x1b]]
    %v573 = vstv %s572
    %v574 = vmul.f32 %v568, %v573
    %v575 = vmul.f32 %v569, %v573
    %v576 = vmul.f32 %v570, %v573
    %v577 = vmul.f32 %v571, %v573
    %v578 = vadd.f32 %v434, %v574
    %v579 = vadd.f32 %v435, %v575
    %v580 = vadd.f32 %v436, %v576
    %v581 = vadd.f32 %v437, %v577
    %s582 = sld [smem:[#allocation8 + $0x1c]]
    %v583 = vstv %s582
    %v584 = vmul.f32 %v568, %v583
    %v585 = vmul.f32 %v569, %v583
    %v586 = vmul.f32 %v570, %v583
    %v587 = vmul.f32 %v571, %v583
    %v588 = vadd.f32 %v444, %v584
    %v589 = vadd.f32 %v445, %v585
    %v590 = vadd.f32 %v446, %v586
    %v591 = vadd.f32 %v447, %v587
    %s592 = sld [smem:[#allocation8 + $0x1d]]
    %v593 = vstv %s592
    %v594 = vmul.f32 %v568, %v593
    %v595 = vmul.f32 %v569, %v593
    %v596 = vmul.f32 %v570, %v593
    %v597 = vmul.f32 %v571, %v593
    %v598 = vadd.f32 %v454, %v594
    %v599 = vadd.f32 %v455, %v595
    %v600 = vadd.f32 %v456, %v596
    %v601 = vadd.f32 %v457, %v597
    %s602 = sld [smem:[#allocation8 + $0x1e]]
    %v603 = vstv %s602
    %v604 = vmul.f32 %v568, %v603
    %v605 = vmul.f32 %v569, %v603
    %v606 = vmul.f32 %v570, %v603
    %v607 = vmul.f32 %v571, %v603
    %v608 = vadd.f32 %v464, %v604
    %v609 = vadd.f32 %v465, %v605
    %v610 = vadd.f32 %v466, %v606
    %v611 = vadd.f32 %v467, %v607
    %s612 = sld [smem:[#allocation8 + $0x1f]]
    %v613 = vstv %s612
    %v614 = vmul.f32 %v568, %v613
    %v615 = vmul.f32 %v569, %v613
    %v616 = vmul.f32 %v570, %v613
    %v617 = vmul.f32 %v571, %v613
    %v618 = vadd.f32 %v474, %v614
    %v619 = vadd.f32 %v475, %v615
    %v620 = vadd.f32 %v476, %v616
    %v621 = vadd.f32 %v477, %v617
    %s622 = sld [smem:[#allocation8 + $0x20]]
    %v623 = vstv %s622
    %v624 = vmul.f32 %v568, %v623
    %v625 = vmul.f32 %v569, %v623
    %v626 = vmul.f32 %v570, %v623
    %v627 = vmul.f32 %v571, %v623
    %v628 = vadd.f32 %v484, %v624
    %v629 = vadd.f32 %v485, %v625
    %v630 = vadd.f32 %v486, %v626
    %v631 = vadd.f32 %v487, %v627
    %s632 = sld [smem:[#allocation8 + $0x21]]
    %v633 = vstv %s632
    %v634 = vmul.f32 %v568, %v633
    %v635 = vmul.f32 %v569, %v633
    %v636 = vmul.f32 %v570, %v633
    %v637 = vmul.f32 %v571, %v633
    %v638 = vadd.f32 %v494, %v634
    %v639 = vadd.f32 %v495, %v635
    %v640 = vadd.f32 %v496, %v636
    %v641 = vadd.f32 %v497, %v637
    %s642 = sld [smem:[#allocation8 + $0x22]]
    %v643 = vstv %s642
    %v644 = vmul.f32 %v568, %v643
    %v645 = vmul.f32 %v569, %v643
    %v646 = vmul.f32 %v570, %v643
    %v647 = vmul.f32 %v571, %v643
    %v648 = vadd.f32 %v504, %v644
    %v649 = vadd.f32 %v505, %v645
    %v650 = vadd.f32 %v506, %v646
    %v651 = vadd.f32 %v507, %v647
    %s652 = sld [smem:[#allocation8 + $0x23]]
    %v653 = vstv %s652
    %v654 = vmul.f32 %v568, %v653
    %v655 = vmul.f32 %v569, %v653
    %v656 = vmul.f32 %v570, %v653
    %v657 = vmul.f32 %v571, %v653
    %v658 = vadd.f32 %v514, %v654
    %v659 = vadd.f32 %v515, %v655
    %v660 = vadd.f32 %v516, %v656
    %v661 = vadd.f32 %v517, %v657
    %vm666 = vcmask 1041409
    %v667 = vsel %vm666, %v580, %v578
    %v668 = vsel %vm666, %v581, %v579
    %671 = vrot.lane.b32.xlu0 %v667, 17
    %v672 = vpop.permute.xlu0 %671
    %673 = vrot.lane.b32.xlu0 %v668, 17
    %v674 = vpop.permute.xlu0 %673
    %v675 = vlaneseq
    %v676 = vand.u32 %v675, 127
    %vm677 = vcmp.lt.s32.totalorder %v676, 17
    %v678 = vsel %vm677, %v672, %v674
    %v679 = vsel %vm677, %v674, %v672
    %v680 = vld [vmem:[#allocation12] ss:$8 sm:$0x3]
    %v682 = vlaneseq
    %v683 = vshrl.u32 %v682, 7
    %v684 = vsub.s32 0, %v683
    %v685 = vrot.slane %v680, %v684
    %v686 = vlaneseq
    %v687 = vshrl.u32 %v686, 7
    %v688 = vsub.s32 1, %v687
    %v689 = vrot.slane %v680, %v688
    %v692 = vmul.f32 %v679, %v685
    %v693 = vmul.f32 %v678, %v689
    %v694 = vadd.f32 %v692, 0.0
    %v695 = vadd.f32 %v693, 0.0
    %v700 = vsel %vm666, %v590, %v588
    %v701 = vsel %vm666, %v591, %v589
    %704 = vrot.lane.b32.xlu0 %v700, 16
    %v705 = vpop.permute.xlu0 %704
    %706 = vrot.lane.b32.xlu0 %v701, 16
    %v707 = vpop.permute.xlu0 %706
    %vm708 = vcmp.lt.s32.totalorder %v676, 16
    %v709 = vsel %vm708, %v705, %v707
    %v710 = vsel %vm708, %v707, %v705
    %s711 = scalar_lea.vmem [#allocation12], 1
    %v712 = vld [vmem:[%s711] ss:$8 sm:$0x3]
    %v714 = vlaneseq
    %v715 = vshrl.u32 %v714, 7
    %v716 = vsub.s32 0, %v715
    %v717 = vrot.slane %v712, %v716
    %v718 = vlaneseq
    %v719 = vshrl.u32 %v718, 7
    %v720 = vsub.s32 1, %v719
    %v721 = vrot.slane %v712, %v720
    %v724 = vmul.f32 %v710, %v717
    %v725 = vmul.f32 %v709, %v721
    %v726 = vadd.f32 %v694, %v724
    %v727 = vadd.f32 %v695, %v725
    %v732 = vsel %vm666, %v600, %v598
    %v733 = vsel %vm666, %v601, %v599
    %736 = vrot.lane.b32.xlu0 %v732, 15
    %v737 = vpop.permute.xlu0 %736
    %738 = vrot.lane.b32.xlu0 %v733, 15
    %v739 = vpop.permute.xlu0 %738
    %vm740 = vcmp.lt.s32.totalorder %v676, 15
    %v741 = vsel %vm740, %v737, %v739
    %v742 = vsel %vm740, %v739, %v737
    %s743 = scalar_lea.vmem [#allocation12], 2
    %v744 = vld [vmem:[%s743] ss:$8 sm:$0x3]
    %v746 = vlaneseq
    %v747 = vshrl.u32 %v746, 7
    %v748 = vsub.s32 0, %v747
    %v749 = vrot.slane %v744, %v748
    %v750 = vlaneseq
    %v751 = vshrl.u32 %v750, 7
    %v752 = vsub.s32 1, %v751
    %v753 = vrot.slane %v744, %v752
    %v756 = vmul.f32 %v742, %v749
    %v757 = vmul.f32 %v741, %v753
    %v758 = vadd.f32 %v726, %v756
    %v759 = vadd.f32 %v727, %v757
    %v764 = vsel %vm666, %v610, %v608
    %v765 = vsel %vm666, %v611, %v609
    %768 = vrot.lane.b32.xlu0 %v764, 1
    %v769 = vpop.permute.xlu0 %768
    %770 = vrot.lane.b32.xlu0 %v765, 1
    %v771 = vpop.permute.xlu0 %770
    %vm772 = vcmp.lt.s32.totalorder %v676, 1
    %v773 = vsel %vm772, %v769, %v771
    %v774 = vsel %vm772, %v771, %v769
    %s775 = scalar_lea.vmem [#allocation12], 3
    %v776 = vld [vmem:[%s775] ss:$8 sm:$0x3]
    %v778 = vlaneseq
    %v779 = vshrl.u32 %v778, 7
    %v780 = vsub.s32 0, %v779
    %v781 = vrot.slane %v776, %v780
    %v782 = vlaneseq
    %v783 = vshrl.u32 %v782, 7
    %v784 = vsub.s32 1, %v783
    %v785 = vrot.slane %v776, %v784
    %v788 = vmul.f32 %v774, %v781
    %v789 = vmul.f32 %v773, %v785
    %v790 = vadd.f32 %v758, %v788
    %v791 = vadd.f32 %v759, %v789
    %s792 = scalar_lea.vmem [#allocation12], 4
    %v793 = vld [vmem:[%s792] ss:$8 sm:$0x3]
    %v795 = vlaneseq
    %v796 = vshrl.u32 %v795, 7
    %v797 = vsub.s32 0, %v796
    %v798 = vrot.slane %v793, %v797
    %v799 = vlaneseq
    %v800 = vshrl.u32 %v799, 7
    %v801 = vsub.s32 1, %v800
    %v802 = vrot.slane %v793, %v801
    %v805 = vmul.f32 %v618, %v798
    %v806 = vmul.f32 %v619, %v802
    %v807 = vmul.f32 %v620, %v798
    %v808 = vmul.f32 %v621, %v802
    %v813 = vrot.slane %v807, 7
    %v814 = vsel %vm666, %v813, %v805
    %v815 = vrot.slane %v808, 7
    %v816 = vsel %vm666, %v815, %v806
    %v819 = vadd.f32 %v790, %v814
    %v820 = vadd.f32 %v791, %v816
    %v825 = vsel %vm666, %v630, %v628
    %v826 = vsel %vm666, %v631, %v629
    %829 = vrot.lane.b32.xlu0 %v825, 127
    %v830 = vpop.permute.xlu0 %829
    %831 = vrot.lane.b32.xlu0 %v826, 127
    %v832 = vpop.permute.xlu0 %831
    %vm833 = vcmp.lt.s32.totalorder %v676, 127
    %v834 = vsel %vm833, %v830, %v832
    %v835 = vsel %vm833, %v832, %v830
    %s836 = scalar_lea.vmem [#allocation12], 5
    %v837 = vld [vmem:[%s836] ss:$8 sm:$0x3]
    %v839 = vlaneseq
    %v840 = vshrl.u32 %v839, 7
    %v841 = vsub.s32 0, %v840
    %v842 = vrot.slane %v837, %v841
    %v843 = vlaneseq
    %v844 = vshrl.u32 %v843, 7
    %v845 = vsub.s32 1, %v844
    %v846 = vrot.slane %v837, %v845
    %v849 = vmul.f32 %v834, %v842
    %v850 = vmul.f32 %v835, %v846
    %v851 = vadd.f32 %v819, %v849
    %v852 = vadd.f32 %v820, %v850
    %v857 = vsel %vm666, %v640, %v638
    %v858 = vsel %vm666, %v641, %v639
    %861 = vrot.lane.b32.xlu0 %v857, 113
    %v862 = vpop.permute.xlu0 %861
    %863 = vrot.lane.b32.xlu0 %v858, 113
    %v864 = vpop.permute.xlu0 %863
    %vm865 = vcmp.lt.s32.totalorder %v676, 113
    %v866 = vsel %vm865, %v862, %v864
    %v867 = vsel %vm865, %v864, %v862
    %s868 = scalar_lea.vmem [#allocation12], 6
    %v869 = vld [vmem:[%s868] ss:$8 sm:$0x3]
    %v871 = vlaneseq
    %v872 = vshrl.u32 %v871, 7
    %v873 = vsub.s32 0, %v872
    %v874 = vrot.slane %v869, %v873
    %v875 = vlaneseq
    %v876 = vshrl.u32 %v875, 7
    %v877 = vsub.s32 1, %v876
    %v878 = vrot.slane %v869, %v877
    %v881 = vmul.f32 %v866, %v874
    %v882 = vmul.f32 %v867, %v878
    %v883 = vadd.f32 %v851, %v881
    %v884 = vadd.f32 %v852, %v882
    %v889 = vsel %vm666, %v650, %v648
    %v890 = vsel %vm666, %v651, %v649
    %893 = vrot.lane.b32.xlu0 %v889, 112
    %v894 = vpop.permute.xlu0 %893
    %895 = vrot.lane.b32.xlu0 %v890, 112
    %v896 = vpop.permute.xlu0 %895
    %vm897 = vcmp.lt.s32.totalorder %v676, 112
    %v898 = vsel %vm897, %v894, %v896
    %v899 = vsel %vm897, %v896, %v894
    %s900 = scalar_lea.vmem [#allocation12], 7
    %v901 = vld [vmem:[%s900] ss:$8 sm:$0x3]
    %v903 = vlaneseq
    %v904 = vshrl.u32 %v903, 7
    %v905 = vsub.s32 0, %v904
    %v906 = vrot.slane %v901, %v905
    %v907 = vlaneseq
    %v908 = vshrl.u32 %v907, 7
    %v909 = vsub.s32 1, %v908
    %v910 = vrot.slane %v901, %v909
    %v913 = vmul.f32 %v898, %v906
    %v914 = vmul.f32 %v899, %v910
    %v915 = vadd.f32 %v883, %v913
    %v916 = vadd.f32 %v884, %v914
    %v921 = vsel %vm666, %v660, %v658
    %v922 = vsel %vm666, %v661, %v659
    %925 = vrot.lane.b32.xlu0 %v921, 111
    %v926 = vpop.permute.xlu0 %925
    %927 = vrot.lane.b32.xlu0 %v922, 111
    %v928 = vpop.permute.xlu0 %927
    %vm929 = vcmp.lt.s32.totalorder %v676, 111
    %v930 = vsel %vm929, %v926, %v928
    %v931 = vsel %vm929, %v928, %v926
    %s932 = scalar_lea.vmem [#allocation12], 16
    %v933 = vld [vmem:[%s932] ss:$8 sm:$0x3]
    %v935 = vlaneseq
    %v936 = vshrl.u32 %v935, 7
    %v937 = vsub.s32 0, %v936
    %v938 = vrot.slane %v933, %v937
    %v939 = vlaneseq
    %v940 = vshrl.u32 %v939, 7
    %v941 = vsub.s32 1, %v940
    %v942 = vrot.slane %v933, %v941
    %v945 = vmul.f32 %v930, %v938
    %v946 = vmul.f32 %v931, %v942
    %v947 = vadd.f32 %v915, %v945
    %v948 = vadd.f32 %v916, %v946
    %s949 = sld [smem:[#allocation10]]
    %s950 = sld [smem:[#allocation10 + $0x1]]
    %s951 = sld [smem:[#allocation10 + $0x2]]
    %v952 = vstv %s949
    %v953 = vadd.f32 %v947, %v952
    %v954 = vadd.f32 %v948, %v952
    %v955 = vstv %s950
    %v956 = vmul.f32 %v953, %v955
    %v957 = vmul.f32 %v954, %v955
    %v958 = vstv %s951
    %v959 = vadd.f32 %v956, %v958
    %v960 = vadd.f32 %v957, %v958
    %v961 = vxor.u32 %v959, 2147483648
    %v962 = vxor.u32 %v960, 2147483648
    %v963 = vmul.f32 %v961, 1.442695
    %v964 = vpow.pop %v963
    %v965 = vmul.f32 %v962, 1.442695
    %v966 = vpow.pop %v965
    %v967 = vadd.f32 %v964, 1.0
    %v968 = vadd.f32 %v966, 1.0
    %v969 = vrcp.pop %v967
    %v970 = vmul.f32 1.0, %v969
    %v971 = vrcp.pop %v968
    %v972 = vmul.f32 1.0, %v971
    %v973 = vadd.f32 %v970, 1.0
    %v974 = vadd.f32 %v972, 1.0
    %v977 = vcombine.low %v973, %v974
    %v979 = vunpack.c.l.s4 1966171168
    %v980 = vunpack.c.0.s8 %v979
    %v981 = vlaneseq
    %v982 = vshrl.u32 %v981, 7
    %v983 = vsub.s32 %v980, %v982
    %v984 = vrot.slane %v977, %v983
    %v985 = vcombine.high %v984, %v984
    %v987 = vunpack.c.l.s4 1966171168
    %v988 = vunpack.c.0.s8 %v987
    %v989 = vlaneseq
    %v990 = vshrl.u32 %v989, 7
    %v991 = vsub.s32 %v988, %v990
    %v992 = vrot.slane %v984, %v991
    %v994 = vunpack.c.l.s4 1966171168
    %v995 = vunpack.c.0.s8 %v994
    %v996 = vlaneseq
    %v997 = vshrl.u32 %v996, 7
    %v998 = vsub.s32 %v995, %v997
    %v999 = vrot.slane %v985, %v998
    %v1000 = vlaneseq
    %v1001 = vshrl.u32 %v1000, 7
    %v1002 = vsub.s32 0, %v1001
    %v1003 = vrot.slane %v992, %v1002
    %v1004 = vlaneseq
    %v1005 = vshrl.u32 %v1004, 7
    %v1006 = vsub.s32 1, %v1005
    %v1007 = vrot.slane %v992, %v1006
    %v1008 = vlaneseq
    %v1009 = vshrl.u32 %v1008, 7
    %v1010 = vsub.s32 0, %v1009
    %v1011 = vrot.slane %v999, %v1010
    %v1012 = vlaneseq
    %v1013 = vshrl.u32 %v1012, 7
    %v1014 = vsub.s32 1, %v1013
    %v1015 = vrot.slane %v999, %v1014
    %v1016 = vcombine.low %v1003, %v1007
    %v1017 = vcombine.low %v1011, %v1015
    %v1020 = vmul.f32 %v85, %v1016
    %v1021 = vmul.f32 %v86, %v1017
    %1022 = vst [vmem:[#allocation13] sm:$0xff] %v1020
    %1023 = vst [vmem:[#allocation13 + $0x8] sm:$0xff] %v1021
    // Predicated region
    $region46: #{tpu_custom_call.1} parent=1 // pred_check
      _
    $region47: #{tpu_custom_call.1} parent=1 // pred_check_branch
      %1025 = sbr.rel (0) target = $region49
    $region48: #{tpu_custom_call.1} parent=1 // pred_region
      %s1027 = ssub.s32 256, 256
      %1028 = vsyncadd [#allocation4], %s1027
      %s1029 = sshll.u32 [#allocation13], 4
      %s1030 = int_to_ptr.vmem [resolvable:$true] %s1029
      %1035 = dma.vmem_to_hbm [thread:$0]  %s1030, 256, %s6, [#allocation4], 128, 128, 8
    $region49: #{tpu_custom_call.1} parent=1 // pred_fallthru
      _
    // Predicated region
    $region50: #{tpu_custom_call.1} parent=1 // pred_check
      _
    $region51: #{tpu_custom_call.1} parent=1 // pred_check_branch
      %1037 = sbr.rel (0) target = $region53
    $region52: #{tpu_custom_call.1} parent=1 // pred_region
      %1038 = dma.done [#allocation4], 256
    $region53: #{tpu_custom_call.1} parent=1 // pred_fallthru
      _
    %1039 = vsyncpa [#allocation3], 1
    %1040 = vsyncpa [#allocation4], 1
    %1041 = vsyncpa [#allocation5], 1
    %1042 = vsyncpa [#allocation11], 1
    %1043 = vsyncpa [#allocation6], 1
    %1044 = vsyncpa [#allocation9], 1

</llo_original>
